<compile_context>
chip_gen: v6e
topology: v6e:2x2x1
jax: 0.10.0
libtpu: 0.0.40
codegen_flags: <defaults>
</compile_context>

<pallas_src>
import functools

import jax
import jax.numpy as jnp
import numpy as np
from jax.experimental import pallas as pl
from jax.experimental.pallas import tpu as pltpu


# ------------------------- fused autoencoder MLP kernel -------------------------

def _fused_mlp_kernel(a_ref, we0_ref, be0_ref, we1_ref, be1_ref,
                      wd0_ref, bd0_ref, items_ref, wu_ref, bd1_ref,
                      o_ref, *, p):
    f32 = jnp.float32
    # encoder layer 0 (InputLayer: sigmoid(A @ We0 + be0), densified CSR input)
    # TODO(synk): for very large num_users, tile this K dimension (P3 accumulator)
    #   instead of keeping We0 fully resident.
    x = jnp.dot(a_ref[...], we0_ref[...], preferred_element_type=f32)
    x = jax.nn.sigmoid(x + be0_ref[...])
    # encoder layer 1
    x = jnp.dot(x, we1_ref[...], preferred_element_type=f32)
    x = jax.nn.sigmoid(x + be1_ref[...])
    # decoder layer 0
    x = jnp.dot(x, wd0_ref[...], preferred_element_type=f32)
    x = jax.nn.sigmoid(x + bd0_ref[...])
    # LightGCN-fused output layer (inference branch)
    mixed = f32(p) * items_ref[...] + f32(1.0 - p) * x
    # contract over emb_dim against the UN-transposed [num_users, emb_dim] slab
    # (equivalent to mixed @ w_users.T; MXU handles the transposed contraction
    #  natively -> no HBM transpose of light_out needed).
    y = jax.lax.dot_general(mixed, wu_ref[...],
                            dimension_numbers=(((1,), (1,)), ((), ())),
                            preferred_element_type=f32)
    o_ref[...] = y + bd1_ref[...]


def fused_autoencoder_mlp(a, we0, be0, we1, be1, wd0, bd0,
                          items_slice, w_users_slab, bd1, p, *, tm=None):
    """out = (p*items + (1-p)*sigmoid(...dec(enc(a))...)) @ w_users.T + bd1."""
    M, K0 = a.shape
    H1 = we0.shape[1]
    H2 = we1.shape[1]
    H3 = wd0.shape[1]
    N, D = w_users_slab.shape
    assert items_slice.shape == (M, D) and H3 == D

    if tm is None:
        tm = M if M <= 128 else 128
    if tm < M:
        assert tm % 8 == 0, "sub-batch tile must be a multiple of 8 sublanes"

    resident = lambda i: (0, 0)
    batch_tile = lambda i: (i, 0)

    return pl.pallas_call(
        functools.partial(_fused_mlp_kernel, p=float(p)),
        out_shape=jax.ShapeDtypeStruct((M, N), jnp.float32),
        grid=(pl.cdiv(M, tm),),
        in_specs=[
            pl.BlockSpec((tm, K0), batch_tile),   # A (densified ratings)
            pl.BlockSpec((K0, H1), resident),     # We0
            pl.BlockSpec((1, H1),  resident),     # be0
            pl.BlockSpec((H1, H2), resident),     # We1
            pl.BlockSpec((1, H2),  resident),     # be1
            pl.BlockSpec((H2, H3), resident),     # Wd0
            pl.BlockSpec((1, H3),  resident),     # bd0
            pl.BlockSpec((tm, D),  batch_tile),   # items_avg[idx-batch:idx]
            pl.BlockSpec((N, D),   resident),     # light_out[:num_users] (NOT transposed)
            pl.BlockSpec((1, N),   resident),     # bd1
        ],
        out_specs=pl.BlockSpec((tm, N), batch_tile),
        compiler_params=pltpu.CompilerParams(
            dimension_semantics=("parallel",),
            vmem_limit_bytes=48 * 1024 * 1024),
    )(a, we0, be0.reshape(1, H1), we1, be1.reshape(1, H2),
      wd0, bd0.reshape(1, H3), items_slice, w_users_slab, bd1.reshape(1, N))


# --------------------------- LightGCN propagation kernel ---------------------------

def _lightgcn_step_kernel(g_ref, e_ref, acc_in_ref, e_out_ref, acc_out_ref, psum_ref):
    k = pl.program_id(1)

    @pl.when(k == 0)
    def _():
        psum_ref[...] = jnp.zeros_like(psum_ref)

    psum_ref[...] += jnp.dot(g_ref[...], e_ref[...],
                             preferred_element_type=jnp.float32)

    @pl.when(k == pl.num_programs(1) - 1)
    def _():
        e_new = psum_ref[...]
        e_out_ref[...] = e_new                      # emb_{l+1} = graph @ emb_l
        acc_out_ref[...] = acc_in_ref[...] + e_new  # running sum of layer embeddings


def lightgcn_step(graph, emb, acc, *, tm=128, tk=128):
    """Returns (graph @ emb, acc + graph @ emb), tiled over rows and the T reduction."""
    T, D = emb.shape
    tm = min(tm, T)
    tk = min(tk, T)
    assert T % tm == 0 and T % tk == 0, "pad T to the tile size"
    row_map = lambda i, k: (i, 0)
    return pl.pallas_call(
        _lightgcn_step_kernel,
        out_shape=(jax.ShapeDtypeStruct((T, D), jnp.float32),
                   jax.ShapeDtypeStruct((T, D), jnp.float32)),
        grid=(T // tm, T // tk),
        in_specs=[
            pl.BlockSpec((tm, tk), lambda i, k: (i, k)),  # graph tile
            pl.BlockSpec((tk, D),  lambda i, k: (k, 0)),  # emb K-slab
            pl.BlockSpec((tm, D),  row_map),              # running sum in
        ],
        out_specs=(pl.BlockSpec((tm, D), row_map),
                   pl.BlockSpec((tm, D), row_map)),
        scratch_shapes=[pltpu.VMEM((tm, D), jnp.float32)],
        compiler_params=pltpu.CompilerParams(
            dimension_semantics=("parallel", "arbitrary"),
            vmem_limit_bytes=48 * 1024 * 1024),
    )(graph, emb, acc)


def pallas_lightgcn(graph, emb0, n_layers, *, tm=128, tk=128):
    """light_out = mean_{l=0..n_layers} graph^l @ emb0."""
    emb, acc = emb0, emb0
    for _ in range(n_layers):                # short static trip count
        emb, acc = lightgcn_step(graph, emb, acc, tm=tm, tk=tk)
    return acc * (1.0 / float(n_layers + 1))


# ----------------------------- parameters / glue -----------------------------

def xavier_normal(key, shape):
    fan_in, fan_out = shape
    std = float(np.sqrt(2.0 / (fan_in + fan_out)))
    return std * jax.random.normal(key, shape, dtype=jnp.float32)


def init_params(key, layer_sizes, num_users, num_items):
    ks = jax.random.split(key, 8)
    emb_dim = layer_sizes[1]
    params = {
        "emb_user": xavier_normal(ks[0], (num_users, emb_dim)),
        "emb_item": xavier_normal(ks[1], (num_items, emb_dim)),
        "enc_w": [xavier_normal(ks[2 + i], (layer_sizes[i], layer_sizes[i + 1]))
                  for i in range(len(layer_sizes) - 1)],
        "enc_b": [jnp.zeros((layer_sizes[i + 1],), jnp.float32)
                  for i in range(len(layer_sizes) - 1)],
    }
    # layer_num odd -> shift = 2, reversed_enc_layers = reversed(layer_sizes)
    rev = list(reversed(layer_sizes))
    params["dec_w"] = [xavier_normal(ks[5 + i], (rev[i], rev[i + 1]))
                       for i in range(len(rev) - 1)]
    params["dec_b"] = [jnp.zeros((rev[i + 1],), jnp.float32)
                       for i in range(len(rev) - 1)]
    return params


def csr_to_dense(Ap, Aj, Ax, shape):
    dense = np.zeros(shape, np.float32)
    for r in range(shape[0]):
        for k in range(int(Ap[r]), int(Ap[r + 1])):
            dense[r, int(Aj[k])] = float(Ax[k])
    return jnp.asarray(dense)


def fast_autoencoder_forward(params, A_dense, graph, idx, p, n_layers, num_users,
                             *, tm_batch=None):
    # LightGCN propagation (tiled Pallas matmuls with fused layer-sum)
    all_emb = jnp.concatenate([params["emb_user"], params["emb_item"]], axis=0)
    light_out = pallas_lightgcn(graph, all_emb, n_layers)
    w_users_slab = light_out[:num_users]      # [num_users, emb_dim], NOT transposed
    items_avg = light_out[num_users:]         # [num_items, emb_dim]
    batch = A_dense.shape[0]
    # NOTE: idx is a static Python int here; if it ever becomes a traced value,
    # move this slice to scalar-prefetch / pl.ds indexing inside the kernel.
    items_slice = jax.lax.dynamic_slice_in_dim(items_avg, idx - batch, batch, axis=0)

    # Fused encoder + decoder + LightGCN-mix + final projection (single pallas_call)
    return fused_autoencoder_mlp(
        A_dense,
        params["enc_w"][0], params["enc_b"][0],
        params["enc_w"][1], params["enc_b"][1],
        params["dec_w"][0], params["dec_b"][0],
        items_slice, w_users_slab, params["dec_b"][1], p,
        tm=tm_batch)


def reference_forward(params, A_dense, graph, idx, p, n_layers, num_users):
    sig = jax.nn.sigmoid
    x = sig(A_dense @ params["enc_w"][0] + params["enc_b"][0])
    x = sig(x @ params["enc_w"][1] + params["enc_b"][1])
    x = sig(x @ params["dec_w"][0] + params["dec_b"][0])
    all_emb = jnp.concatenate([params["emb_user"], params["emb_item"]], axis=0)
    embs = [all_emb]
    e = all_emb
    for _ in range(n_layers):
        e = graph @ e
        embs.append(e)
    light_out = jnp.mean(jnp.stack(embs, axis=1), axis=1)
    w_users = light_out[:num_users].T
    items_avg = light_out[num_users:]
    items_slice = items_avg[idx - x.shape[0]:idx]
    x = p * items_slice + (1.0 - p) * x
    return x @ w_users + params["dec_b"][1]


# ----------------------------- main -----------------------------

if __name__ == "__main__":
    # Small, shape-consistent, lane-dense config:
    #   layer_sizes[0] == num_users (item-based autoencoder), layer_num = 3 (odd),
    #   feature dims that hit HBM are multiples of 128; the 32-wide latent stays in VMEM.
    num_users, num_items = 128, 128
    layer_sizes = [num_users, 128, 32]
    batch = 16
    p_mix = 0.3
    n_layers = 2
    idx = batch                       # globalData['idx']: slice items_avg[0:batch]

    key = jax.random.PRNGKey(0)
    k_params, k_ratings, k_graph = jax.random.split(key, 3)
    params = init_params(k_params, layer_sizes, num_users, num_items)

    # sparse input batch (CSR over [batch, num_users]) built from a dense draw
    dense_ratings = (jax.random.uniform(k_ratings, (batch, num_users)) > 0.8)
    dense_ratings = np.asarray(dense_ratings, np.float32)
    Ap = np.zeros((batch + 1,), np.int32)
    Aj_list, Ax_list = [], []
    for r in range(batch):
        cols = np.nonzero(dense_ratings[r])[0]
        Aj_list.extend(cols.tolist())
        Ax_list.extend(dense_ratings[r, cols].tolist())
        Ap[r + 1] = Ap[r] + len(cols)
    Aj = np.asarray(Aj_list, np.int32)
    Ax = np.asarray(Ax_list, np.float32)
    A_dense = csr_to_dense(Ap, Aj, Ax, (batch, num_users))

    # LightGCN normalized bipartite adjacency (dense stand-in for torch.sparse graph)
    R = np.asarray(jax.random.uniform(k_graph, (num_users, num_items)) > 0.85,
                   np.float32)
    T = num_users + num_items
    A = np.zeros((T, T), np.float32)
    A[:num_users, num_users:] = R
    A[num_users:, :num_users] = R.T
    deg = A.sum(axis=1)
    d_inv_sqrt = np.where(deg > 0, 1.0 / np.sqrt(np.maximum(deg, 1e-12)), 0.0)
    graph = jnp.asarray(d_inv_sqrt[:, None] * A * d_inv_sqrt[None, :], jnp.float32)

    out = fast_autoencoder_forward(params, A_dense, graph, idx, p_mix,
                                   n_layers, num_users, tm_batch=8)
    out = jax.block_until_ready(out)

    ref = reference_forward(params, A_dense, graph, idx, p_mix,
                            n_layers, num_users)
    # DEFAULT MXU precision (bf16 passes, f32 accumulation) on both paths; tolerance
    # covers rounding-order differences introduced by tiling.
    np.testing.assert_allclose(np.asarray(out), np.asarray(ref),
                               rtol=5e-3, atol=5e-3)
    assert out.shape == (batch, num_users)
    print("KERNEL_OK")
</pallas_src>

<mosaic_0001>
module attributes {stable_mosaic.version = 11 : i64} {
  func.func @_lightgcn_step_kernel(%arg0: i32, %arg1: i32, %arg2: memref<128x128xf32, #tpu.memory_space<vmem>>, %arg3: memref<128x128xf32, #tpu.memory_space<vmem>>, %arg4: memref<128x128xf32, #tpu.memory_space<vmem>>, %arg5: memref<128x128xf32, #tpu.memory_space<vmem>>, %arg6: memref<128x128xf32, #tpu.memory_space<vmem>>, %arg7: memref<128x128xf32, #tpu.memory_space<vmem>>) attributes {dimension_semantics = [#tpu.dimension_semantics<parallel>, #tpu.dimension_semantics<arbitrary>], iteration_bounds = array<i64: 2, 2>, scalar_prefetch = 0 : i64, scratch_operands = 1 : i64, tpu.core_type = #tpu.core_type<tc>, window_params = [{transform_indices = @transform_0, window_bounds = array<i64: 128, 128>}, {transform_indices = @transform_1, window_bounds = array<i64: 128, 128>}, {transform_indices = @transform_2, window_bounds = array<i64: 128, 128>}, {transform_indices = @transform_3, window_bounds = array<i64: 128, 128>}, {transform_indices = @transform_4, window_bounds = array<i64: 128, 128>}]} {
    %c0_i32 = arith.constant 0 : i32
    %0 = arith.cmpi eq, %arg1, %c0_i32 : i32
    %1 = arith.extui %0 : i1 to i32
    %c0_i32_0 = arith.constant 0 : i32
    %2 = arith.cmpi ne, %1, %c0_i32_0 : i32
    scf.if %2 {
      %cst_9 = arith.constant 0.000000e+00 : f32
      %12 = vector.broadcast %cst_9 : f32 to vector<128x128xf32>
      %c0_10 = arith.constant 0 : index
      %c0_11 = arith.constant 0 : index
      %13 = vector.load %arg7[%c0_10, %c0_11] : memref<128x128xf32, #tpu.memory_space<vmem>>, vector<128x128xf32>
      tpu.vector_store %arg7[%c0_10, %c0_11], %12 {strides = array<i32>} : memref<128x128xf32, #tpu.memory_space<vmem>>, vector<128x128xf32>,
    } else {
    }
    %c0 = arith.constant 0 : index
    %c0_1 = arith.constant 0 : index
    %3 = vector.load %arg7[%c0, %c0_1] : memref<128x128xf32, #tpu.memory_space<vmem>>, vector<128x128xf32>
    %c0_2 = arith.constant 0 : index
    %c0_3 = arith.constant 0 : index
    %4 = vector.load %arg2[%c0_2, %c0_3] : memref<128x128xf32, #tpu.memory_space<vmem>>, vector<128x128xf32>
    %c0_4 = arith.constant 0 : index
    %c0_5 = arith.constant 0 : index
    %5 = vector.load %arg3[%c0_4, %c0_5] : memref<128x128xf32, #tpu.memory_space<vmem>>, vector<128x128xf32>
    %cst = arith.constant dense<0.000000e+00> : vector<128x128xf32>
    %6 = tpu.matmul %4, %5, %cst {dimension_numbers = #tpu.dot_dimension_numbers<[1], [0], [0], [1], [0, 0, 1, 1], [], []>} : vector<128x128xf32>, vector<128x128xf32>, vector<128x128xf32> -> vector<128x128xf32>
    %7 = arith.addf %3, %6 : vector<128x128xf32>
    %c0_6 = arith.constant 0 : index
    %c0_7 = arith.constant 0 : index
    %8 = vector.load %arg7[%c0_6, %c0_7] : memref<128x128xf32, #tpu.memory_space<vmem>>, vector<128x128xf32>
    tpu.vector_store %arg7[%c0_6, %c0_7], %7 {strides = array<i32>} : memref<128x128xf32, #tpu.memory_space<vmem>>, vector<128x128xf32>,
    %c1_i32 = arith.constant 1 : i32
    %9 = arith.cmpi eq, %arg1, %c1_i32 : i32
    %10 = arith.extui %9 : i1 to i32
    %c0_i32_8 = arith.constant 0 : i32
    %11 = arith.cmpi ne, %10, %c0_i32_8 : i32
    scf.if %11 {
      %c0_9 = arith.constant 0 : index
      %c0_10 = arith.constant 0 : index
      %12 = vector.load %arg7[%c0_9, %c0_10] : memref<128x128xf32, #tpu.memory_space<vmem>>, vector<128x128xf32>
      %c0_11 = arith.constant 0 : index
      %c0_12 = arith.constant 0 : index
      %13 = vector.load %arg5[%c0_11, %c0_12] : memref<128x128xf32, #tpu.memory_space<vmem>>, vector<128x128xf32>
      tpu.vector_store %arg5[%c0_11, %c0_12], %12 {strides = array<i32>} : memref<128x128xf32, #tpu.memory_space<vmem>>, vector<128x128xf32>,
      %c0_13 = arith.constant 0 : index
      %c0_14 = arith.constant 0 : index
      %14 = vector.load %arg4[%c0_13, %c0_14] : memref<128x128xf32, #tpu.memory_space<vmem>>, vector<128x128xf32>
      %15 = arith.addf %14, %12 : vector<128x128xf32>
      %c0_15 = arith.constant 0 : index
      %c0_16 = arith.constant 0 : index
      %16 = vector.load %arg6[%c0_15, %c0_16] : memref<128x128xf32, #tpu.memory_space<vmem>>, vector<128x128xf32>
      tpu.vector_store %arg6[%c0_15, %c0_16], %15 {strides = array<i32>} : memref<128x128xf32, #tpu.memory_space<vmem>>, vector<128x128xf32>,
    } else {
    }
    return
  }
  func.func @transform_0(%arg0: i32, %arg1: i32) -> (i32, i32) {
    %c0_i32 = arith.constant 0 : i32
    return %arg0, %arg1 : i32, i32
  }
  func.func @transform_1(%arg0: i32, %arg1: i32) -> (i32, i32) {
    %c0_i32 = arith.constant 0 : i32
    %c0_i32_0 = arith.constant 0 : i32
    return %arg1, %c0_i32 : i32, i32
  }
  func.func @transform_2(%arg0: i32, %arg1: i32) -> (i32, i32) {
    %c0_i32 = arith.constant 0 : i32
    %c0_i32_0 = arith.constant 0 : i32
    return %arg0, %c0_i32 : i32, i32
  }
  func.func @transform_3(%arg0: i32, %arg1: i32) -> (i32, i32) {
    %c0_i32 = arith.constant 0 : i32
    %c0_i32_0 = arith.constant 0 : i32
    return %arg0, %c0_i32 : i32, i32
  }
  func.func @transform_4(%arg0: i32, %arg1: i32) -> (i32, i32) {
    %c0_i32 = arith.constant 0 : i32
    %c0_i32_0 = arith.constant 0 : i32
    return %arg0, %c0_i32 : i32, i32
  }
}

</mosaic_0001>

<llo_original>
// kernel: tpu_custom_call.1
$region0: #{tpu_custom_call.1}
  #allocation0 [shape = 'u32[]', space=smem, size = 0x4, offset = 0x4, fixed_abs, tag = 'smem constant byte address 0x4 - core index']
  #allocation1 [shape = 'u32[144,128]{1,0:T(1,128)}', space=vmem, size = 0x12000, scoped, tag = 'internal scratch']
  #allocation2 [shape = 'f32[128,128]{1,0:T(8,128)}', space=vmem, size = 0x10000, scoped, tag = 'scratch operand']
  %s0 = inlined_call_operand.hbm [shape: f32[256,256], index: 0, kind: input, shape index: {}]
  %s1 = inlined_call_operand.hbm [shape: f32[256,128], index: 1, kind: input, shape index: {}]
  %s2 = inlined_call_operand.hbm [shape: f32[256,128], index: 2, kind: input, shape index: {}]
  %s3 = inlined_call_operand.hbm [shape: f32[256,128], index: 3, kind: output, shape index: {0}]
  %s4 = inlined_call_operand.hbm [shape: f32[256,128], index: 4, kind: output, shape index: {1}]
  %5 = xla_tuple %s3, %s4
  %s6 = sld [smem:[#allocation0]]
  $region73: #{tpu_custom_call.1} parent=0
    _
  %s8 = ssub.s32 1, %s6
  %s9 = scalar_select 0, %s8, %s6
  $region1: #{tpu_custom_call.1} parent=0
    #allocation3 [shape = 'u8[131072]{0}', space=vmem, size = 0x20000, scoped, tag = 'input window, operand 0']
    #allocation4 [shape = 's32[2]{0}', space=sflag, size = 0x8, scoped, tag = 'scoped memory for tpu_custom_call.1']
    #allocation5 [shape = 's32[2]{0}', space=sflag, size = 0x8, scoped, tag = 'scoped memory for tpu_custom_call.1']
    #allocation6 [shape = 'u8[131072]{0}', space=vmem, size = 0x20000, scoped, tag = 'input window, operand 1']
    #allocation7 [shape = 's32[2]{0}', space=sflag, size = 0x8, scoped, tag = 'scoped memory for tpu_custom_call.1']
    #allocation8 [shape = 'u8[131072]{0}', space=vmem, size = 0x20000, scoped, tag = 'input window, operand 2']
    #allocation9 [shape = 'u8[131072]{0}', space=vmem, size = 0x20000, scoped, tag = 'output window, operand 0']
    #allocation10 [shape = 'u8[131072]{0}', space=vmem, size = 0x20000, scoped, tag = 'output window, operand 1']
    #allocation11 [shape = 's32[2]{0}', space=sflag, size = 0x8, scoped, tag = 'scoped memory for tpu_custom_call.1']
    %10 = vsyncpa [#allocation4], 0
    %s11 = scalar_lea.sflag [#allocation4], 1
    %12 = vsyncpa %s11, 0
    %13 = vsyncpa [#allocation7], 0
    %s14 = scalar_lea.sflag [#allocation7], 1
    %15 = vsyncpa %s14, 0
    %16 = vsyncpa [#allocation5], 0
    %s17 = scalar_lea.sflag [#allocation5], 1
    %18 = vsyncpa %s17, 0
    %19 = vsyncpa [#allocation11], 0
    %s20 = scalar_lea.sflag [#allocation11], 1
    %21 = vsyncpa %s20, 0
    loop: start=0, step=1, limit=6
    $region2: #{tpu_custom_call.1} parent=1 // loop_pre_header
      _
    $region3: #{tpu_custom_call.1} parent=1 // loop_header
      %s23 = sphi 0, %s27
      %p24 = scmp.ge.s32.totalorder %s23, 6
      %s30 = sphi 0, %s42
      %s31 = sphi 0, %s38
      %s32 = sphi 0, %s30
      %s33 = sphi 0, %s31
      %s34 = sphi 0, %s32
      %s35 = sphi 0, %s33
      %s47 = sphi 0, %s49
      %s50 = sphi 0, %s47
      %s51 = sphi 0, %s50
      %s67 = sphi 0, %s51
      %s73 = sphi 0, %s75
      %s76 = sphi 0, %s73
      %s77 = sphi 0, %s76
      %s93 = sphi 0, %s77
      %s99 = sphi 0, %s101
      %s102 = sphi 0, %s99
      %s103 = sphi 0, %s102
      %s119 = sphi 0, %s103
      %s125 = sphi 0, %s127
      %s128 = sphi 0, %s125
      %s129 = sphi 0, %s128
      %s145 = sphi 0, %s129
      %s151 = sphi 0, %s153
      %s154 = sphi 0, %s151
      %s155 = sphi 0, %s154
      %s171 = sphi 0, %s155
    $region4: #{tpu_custom_call.1} parent=1 // loop_header_branch
      %26 = sbr.rel (%p24) target = $region8
    $region5: #{tpu_custom_call.1} parent=1 // loop_body
      %s28 = ssub.s32 %s23, 1
      %s29 = ssub.s32 %s23, 2
      %s36 = sadd.s32 1, %s31
      %p37 = scmp.ge.s32.totalorder %s36, 2
      %s38 = scalar_select %p37, 0, %s36
      %s39 = sadd.s32 1, %s30
      %s40 = scalar_select %p37, %s39, %s30
      %p41 = scmp.ge.s32.totalorder %s40, 2
      %s42 = scalar_select %p41, 0, %s40
      %s43 = ssub.s32 %s30, %s42
      %s44 = ssub.s32 %s31, %s38
      %s45 = sor.u32 %s43, %s44
      %p46 = scmp.eq.s32.totalorder %s45, 0
      %s48 = sadd.s32 %s47, 1
      %s49 = scalar_select %p46, %s47, %s48
      %p52 = pneg %p46
      %p53 = scmp.eq.s32.totalorder %s23, 3
      %p54 = por %p52, %p53
      %p55 = scmp.ne.s32.totalorder %s47, %s50
      %p56 = scmp.eq.s32.totalorder %s23, 0
      %p57 = por %p55, %p56
      %p58 = scmp.ne.s32.totalorder %s47, %s50
      %p59 = scmp.eq.s32.totalorder %s28, 3
      %p60 = por %p58, %p59
      %p61 = scmp.ne.s32.totalorder %s50, %s51
      %p62 = scmp.eq.s32.totalorder %s28, 0
      %p63 = por %p61, %p62
      %p64 = scmp.ne.s32.totalorder %s50, %s51
      %p65 = scmp.eq.s32.totalorder %s29, 3
      %p66 = por %p64, %p65
      %p68 = scmp.ne.s32.totalorder %s51, %s67
      %p69 = scmp.eq.s32.totalorder %s29, 0
      %p70 = por %p68, %p69
      %s71 = ssub.s32 %s31, %s38
      %p72 = scmp.eq.s32.totalorder %s71, 0
      %s74 = sadd.s32 %s73, 1
      %s75 = scalar_select %p72, %s73, %s74
      %p78 = pneg %p72
      %p79 = scmp.eq.s32.totalorder %s23, 3
      %p80 = por %p78, %p79
      %p81 = scmp.ne.s32.totalorder %s73, %s76
      %p82 = scmp.eq.s32.totalorder %s23, 0
      %p83 = por %p81, %p82
      %p84 = scmp.ne.s32.totalorder %s73, %s76
      %p85 = scmp.eq.s32.totalorder %s28, 3
      %p86 = por %p84, %p85
      %p87 = scmp.ne.s32.totalorder %s76, %s77
      %p88 = scmp.eq.s32.totalorder %s28, 0
      %p89 = por %p87, %p88
      %p90 = scmp.ne.s32.totalorder %s76, %s77
      %p91 = scmp.eq.s32.totalorder %s29, 3
      %p92 = por %p90, %p91
      %p94 = scmp.ne.s32.totalorder %s77, %s93
      %p95 = scmp.eq.s32.totalorder %s29, 0
      %p96 = por %p94, %p95
      %s97 = ssub.s32 %s30, %s42
      %p98 = scmp.eq.s32.totalorder %s97, 0
      %s100 = sadd.s32 %s99, 1
      %s101 = scalar_select %p98, %s99, %s100
      %p104 = pneg %p98
      %p105 = scmp.eq.s32.totalorder %s23, 3
      %p106 = por %p104, %p105
      %p107 = scmp.ne.s32.totalorder %s99, %s102
      %p108 = scmp.eq.s32.totalorder %s23, 0
      %p109 = por %p107, %p108
      %p110 = scmp.ne.s32.totalorder %s99, %s102
      %p111 = scmp.eq.s32.totalorder %s28, 3
      %p112 = por %p110, %p111
      %p113 = scmp.ne.s32.totalorder %s102, %s103
      %p114 = scmp.eq.s32.totalorder %s28, 0
      %p115 = por %p113, %p114
      %p116 = scmp.ne.s32.totalorder %s102, %s103
      %p117 = scmp.eq.s32.totalorder %s29, 3
      %p118 = por %p116, %p117
      %p120 = scmp.ne.s32.totalorder %s103, %s119
      %p121 = scmp.eq.s32.totalorder %s29, 0
      %p122 = por %p120, %p121
      %s123 = ssub.s32 %s30, %s42
      %p124 = scmp.eq.s32.totalorder %s123, 0
      %s126 = sadd.s32 %s125, 1
      %s127 = scalar_select %p124, %s125, %s126
      %p130 = pneg %p124
      %p131 = scmp.eq.s32.totalorder %s23, 3
      %p132 = por %p130, %p131
      %p133 = scmp.ne.s32.totalorder %s125, %s128
      %p134 = scmp.eq.s32.totalorder %s23, 0
      %p135 = por %p133, %p134
      %p136 = scmp.ne.s32.totalorder %s125, %s128
      %p137 = scmp.eq.s32.totalorder %s28, 3
      %p138 = por %p136, %p137
      %p139 = scmp.ne.s32.totalorder %s128, %s129
      %p140 = scmp.eq.s32.totalorder %s28, 0
      %p141 = por %p139, %p140
      %p142 = scmp.ne.s32.totalorder %s128, %s129
      %p143 = scmp.eq.s32.totalorder %s29, 3
      %p144 = por %p142, %p143
      %p146 = scmp.ne.s32.totalorder %s129, %s145
      %p147 = scmp.eq.s32.totalorder %s29, 0
      %p148 = por %p146, %p147
      %s149 = ssub.s32 %s30, %s42
      %p150 = scmp.eq.s32.totalorder %s149, 0
      %s152 = sadd.s32 %s151, 1
      %s153 = scalar_select %p150, %s151, %s152
      %p156 = pneg %p150
      %p157 = scmp.eq.s32.totalorder %s23, 3
      %p158 = por %p156, %p157
      %p159 = scmp.ne.s32.totalorder %s151, %s154
      %p160 = scmp.eq.s32.totalorder %s23, 0
      %p161 = por %p159, %p160
      %p162 = scmp.ne.s32.totalorder %s151, %s154
      %p163 = scmp.eq.s32.totalorder %s28, 3
      %p164 = por %p162, %p163
      %p165 = scmp.ne.s32.totalorder %s154, %s155
      %p166 = scmp.eq.s32.totalorder %s28, 0
      %p167 = por %p165, %p166
      %p168 = scmp.ne.s32.totalorder %s154, %s155
      %p169 = scmp.eq.s32.totalorder %s29, 3
      %p170 = por %p168, %p169
      %p172 = scmp.ne.s32.totalorder %s155, %s171
      %p173 = scmp.eq.s32.totalorder %s29, 0
      %p174 = por %p172, %p173
      %p175 = scmp.le.s32.totalorder 1, %s23
      %p176 = scmp.lt.s32.totalorder %s23, 5
      %p177 = pnand %p175, %p176
      %p178 = pneg %p177
      // Predicated region
      $region9: #{tpu_custom_call.1} parent=5 // pred_check
        _
      $region10: #{tpu_custom_call.1} parent=5 // pred_check_branch
        %180 = sbr.rel (%p177) target = $region12
      $region11: #{tpu_custom_call.1} parent=5 // pred_region
        %s181 = ssub.s32 %s23, 1
      $region12: #{tpu_custom_call.1} parent=5 // pred_fallthru
        _
      %p182 = scmp.lt.s32.totalorder %s23, 4
      // Predicated region
      $region13: #{tpu_custom_call.1} parent=5 // pred_check
        %p183 = pneg %p182
      $region14: #{tpu_custom_call.1} parent=5 // pred_check_branch
        %185 = sbr.rel (%p183) target = $region16
      $region15: #{tpu_custom_call.1} parent=5 // pred_region
        // Predicated region
        $region17: #{tpu_custom_call.1} parent=15 // pred_check
          %p186 = pneg %p57
        $region18: #{tpu_custom_call.1} parent=15 // pred_check_branch
          %188 = sbr.rel (%p186) target = $region20
        $region19: #{tpu_custom_call.1} parent=15 // pred_region
          %s189 = sand.u32 %s47, 1
          %s190 = scalar_lea.sflag [#allocation4], %s189
          %s191 = sand.u32 %s47, 1
          %s192 = smul.addr %s191, 128
          %s193 = scalar_lea.vmem [#allocation3], %s192
          %s194 = smul.u32 16, %s30
          %s196 = ssub.s32 2048, 2048
          %197 = vsyncadd %s190, %s196
          %s198 = smul.addr %s194, 2
          %s199 = sadd.s32 %s31, %s198
          %s200 = smul.addr %s199, 128
          %s201 = scalar_lea.hbm %s0, %s200
          %s202 = sshll.u32 %s193, 4
          %s203 = int_to_ptr.vmem [resolvable:$true] %s202
          %208 = dma.hbm_to_vmem [thread:$0]  %s201, 2048, %s203, %s190, 256, 128, 8
        $region20: #{tpu_custom_call.1} parent=15 // pred_fallthru
          _
        // Predicated region
        $region21: #{tpu_custom_call.1} parent=15 // pred_check
          %p209 = pneg %p83
        $region22: #{tpu_custom_call.1} parent=15 // pred_check_branch
          %211 = sbr.rel (%p209) target = $region24
        $region23: #{tpu_custom_call.1} parent=15 // pred_region
          %s212 = sand.u32 %s23, 1
          %s213 = scalar_lea.sflag [#allocation7], %s212
          %s214 = sand.u32 %s73, 1
          %s215 = smul.addr %s214, 128
          %s216 = scalar_lea.vmem [#allocation6], %s215
          %s217 = smul.u32 16, %s31
          %s219 = ssub.s32 2048, 2048
          %220 = vsyncadd %s213, %s219
          %s221 = smul.addr %s217, 128
          %s222 = scalar_lea.hbm %s1, %s221
          %s223 = sshll.u32 %s216, 4
          %s224 = int_to_ptr.vmem [resolvable:$true] %s223
          %229 = dma.hbm_to_vmem [thread:$0]  %s222, 2048, %s224, %s213, 128, 128, 8
        $region24: #{tpu_custom_call.1} parent=15 // pred_fallthru
          _
        // Predicated region
        $region25: #{tpu_custom_call.1} parent=15 // pred_check
          %p230 = pneg %p109
        $region26: #{tpu_custom_call.1} parent=15 // pred_check_branch
          %232 = sbr.rel (%p230) target = $region28
        $region27: #{tpu_custom_call.1} parent=15 // pred_region
          %s233 = sand.u32 %s23, 1
          %s234 = scalar_lea.sflag [#allocation7], %s233
          %s235 = sand.u32 %s99, 1
          %s236 = smul.addr %s235, 128
          %s237 = scalar_lea.vmem [#allocation8], %s236
          %s238 = smul.u32 16, %s30
          %s240 = ssub.s32 2048, 2048
          %241 = vsyncadd %s234, %s240
          %s242 = smul.addr %s238, 128
          %s243 = scalar_lea.hbm %s2, %s242
          %s244 = sshll.u32 %s237, 4
          %s245 = int_to_ptr.vmem [resolvable:$true] %s244
          %250 = dma.hbm_to_vmem [thread:$0]  %s243, 2048, %s245, %s234, 128, 128, 8
        $region28: #{tpu_custom_call.1} parent=15 // pred_fallthru
          _
      $region16: #{tpu_custom_call.1} parent=5 // pred_fallthru
        _
      %p251 = scmp.le.s32.totalorder 1, %s23
      %p252 = scmp.lt.s32.totalorder %s23, 5
      %p253 = pnand %p251, %p252
      %p254 = pneg %p253
      // Predicated region
      $region29: #{tpu_custom_call.1} parent=5 // pred_check
        _
      $region30: #{tpu_custom_call.1} parent=5 // pred_check_branch
        %256 = sbr.rel (%p253) target = $region32
      $region31: #{tpu_custom_call.1} parent=5 // pred_region
        %s257 = ssub.s32 %s23, 1
        %s258 = sand.u32 %s50, 1
        %s259 = scalar_lea.sflag [#allocation4], %s258
        %s260 = sand.u32 %s50, 1
        %s261 = smul.addr %s260, 128
        %s262 = scalar_lea.vmem [#allocation3], %s261
        // Predicated region
        $region33: #{tpu_custom_call.1} parent=31 // pred_check
          %p263 = pneg %p63
        $region34: #{tpu_custom_call.1} parent=31 // pred_check_branch
          %265 = sbr.rel (%p263) target = $region36
        $region35: #{tpu_custom_call.1} parent=31 // pred_region
          %266 = dma.done %s259, 2048
        $region36: #{tpu_custom_call.1} parent=31 // pred_fallthru
          _
        %s267 = sand.u32 %s28, 1
        %s268 = scalar_lea.sflag [#allocation7], %s267
        %s269 = sand.u32 %s76, 1
        %s270 = smul.addr %s269, 128
        %s271 = scalar_lea.vmem [#allocation6], %s270
        // Predicated region
        $region37: #{tpu_custom_call.1} parent=31 // pred_check
          %p272 = pneg %p89
        $region38: #{tpu_custom_call.1} parent=31 // pred_check_branch
          %274 = sbr.rel (%p272) target = $region40
        $region39: #{tpu_custom_call.1} parent=31 // pred_region
          %275 = dma.done %s268, 2048
        $region40: #{tpu_custom_call.1} parent=31 // pred_fallthru
          _
        %s276 = sand.u32 %s28, 1
        %s277 = scalar_lea.sflag [#allocation7], %s276
        %s278 = sand.u32 %s102, 1
        %s279 = smul.addr %s278, 128
        %s280 = scalar_lea.vmem [#allocation8], %s279
        // Predicated region
        $region41: #{tpu_custom_call.1} parent=31 // pred_check
          %p281 = pneg %p115
        $region42: #{tpu_custom_call.1} parent=31 // pred_check_branch
          %283 = sbr.rel (%p281) target = $region44
        $region43: #{tpu_custom_call.1} parent=31 // pred_region
          %284 = dma.done %s277, 2048
        $region44: #{tpu_custom_call.1} parent=31 // pred_fallthru
          _
        %s285 = sand.u32 %s50, 1
        %s286 = scalar_lea.sflag [#allocation4], %s285
        %s287 = sand.u32 %s50, 1
        %s288 = smul.addr %s287, 128
        %s289 = scalar_lea.vmem [#allocation3], %s288
        %p290 = pneg %p63
        %p291 = pneg %p60
        %s292 = sand.u32 %s28, 1
        %s293 = scalar_lea.sflag [#allocation7], %s292
        %s294 = sand.u32 %s76, 1
        %s295 = smul.addr %s294, 128
        %s296 = scalar_lea.vmem [#allocation6], %s295
        %p297 = pneg %p89
        %p298 = pneg %p86
        %s299 = sand.u32 %s28, 1
        %s300 = scalar_lea.sflag [#allocation7], %s299
        %s301 = sand.u32 %s102, 1
        %s302 = smul.addr %s301, 128
        %s303 = scalar_lea.vmem [#allocation8], %s302
        %p304 = pneg %p115
        %p305 = pneg %p112
        %p306 = pneg %p141
        %p307 = pneg %p138
        %s308 = sand.u32 %s128, 1
        %s309 = scalar_lea.sflag [#allocation5], %s308
        %s310 = sand.u32 %s128, 1
        %s311 = smul.addr %s310, 128
        %s312 = scalar_lea.vmem [#allocation9], %s311
        %p313 = pneg %p167
        %p314 = pneg %p164
        %s315 = sand.u32 %s154, 1
        %s316 = scalar_lea.sflag [#allocation11], %s315
        %s317 = sand.u32 %s154, 1
        %s318 = smul.addr %s317, 128
        %s319 = scalar_lea.vmem [#allocation10], %s318
        %s320 = smul.u32 16, %s32
        %s321 = smul.u32 16, %s33
        %s322 = smul.u32 16, %s32
        %s323 = smul.u32 16, %s32
        %s324 = smul.u32 16, %s32
        %p325 = scmp.eq.s32.totalorder %s33, 0
        // Predicated region
        $region45: #{tpu_custom_call.1} parent=31 // pred_check
          %p326 = pneg %p325
        $region46: #{tpu_custom_call.1} parent=31 // pred_check_branch
          %328 = sbr.rel (%p326) target = $region48
        $region47: #{tpu_custom_call.1} parent=31 // pred_region
          %329 = vst [vmem:[#allocation2] sm:$0xff] 0.0
          %330 = vst [vmem:[#allocation2 + $0x8] sm:$0xff] 0.0
          %331 = vst [vmem:[#allocation2 + $0x10] sm:$0xff] 0.0
          %332 = vst [vmem:[#allocation2 + $0x18] sm:$0xff] 0.0
          %333 = vst [vmem:[#allocation2 + $0x20] sm:$0xff] 0.0
          %334 = vst [vmem:[#allocation2 + $0x28] sm:$0xff] 0.0
          %335 = vst [vmem:[#allocation2 + $0x30] sm:$0xff] 0.0
          %336 = vst [vmem:[#allocation2 + $0x38] sm:$0xff] 0.0
          %337 = vst [vmem:[#allocation2 + $0x40] sm:$0xff] 0.0
          %338 = vst [vmem:[#allocation2 + $0x48] sm:$0xff] 0.0
          %339 = vst [vmem:[#allocation2 + $0x50] sm:$0xff] 0.0
          %340 = vst [vmem:[#allocation2 + $0x58] sm:$0xff] 0.0
          %341 = vst [vmem:[#allocation2 + $0x60] sm:$0xff] 0.0
          %342 = vst [vmem:[#allocation2 + $0x68] sm:$0xff] 0.0
          %343 = vst [vmem:[#allocation2 + $0x70] sm:$0xff] 0.0
          %344 = vst [vmem:[#allocation2 + $0x78] sm:$0xff] 0.0
        $region48: #{tpu_custom_call.1} parent=31 // pred_fallthru
          _
        %v345 = vld [vmem:[#allocation2] sm:$0xff]
        %v346 = vld [vmem:[#allocation2 + $0x8] sm:$0xff]
        %v347 = vld [vmem:[#allocation2 + $0x10] sm:$0xff]
        %v348 = vld [vmem:[#allocation2 + $0x18] sm:$0xff]
        %v349 = vld [vmem:[#allocation2 + $0x20] sm:$0xff]
        %v350 = vld [vmem:[#allocation2 + $0x28] sm:$0xff]
        %v351 = vld [vmem:[#allocation2 + $0x30] sm:$0xff]
        %v352 = vld [vmem:[#allocation2 + $0x38] sm:$0xff]
        %v353 = vld [vmem:[#allocation2 + $0x40] sm:$0xff]
        %v354 = vld [vmem:[#allocation2 + $0x48] sm:$0xff]
        %v355 = vld [vmem:[#allocation2 + $0x50] sm:$0xff]
        %v356 = vld [vmem:[#allocation2 + $0x58] sm:$0xff]
        %v357 = vld [vmem:[#allocation2 + $0x60] sm:$0xff]
        %v358 = vld [vmem:[#allocation2 + $0x68] sm:$0xff]
        %v359 = vld [vmem:[#allocation2 + $0x70] sm:$0xff]
        %v360 = vld [vmem:[#allocation2 + $0x78] sm:$0xff]
        %v361 = vld [vmem:[%s262] sm:$0xff]
        %v362 = vld [vmem:[%s262 + $0x8] sm:$0xff]
        %v363 = vld [vmem:[%s262 + $0x10] sm:$0xff]
        %v364 = vld [vmem:[%s262 + $0x18] sm:$0xff]
        %v365 = vld [vmem:[%s262 + $0x20] sm:$0xff]
        %v366 = vld [vmem:[%s262 + $0x28] sm:$0xff]
        %v367 = vld [vmem:[%s262 + $0x30] sm:$0xff]
        %v368 = vld [vmem:[%s262 + $0x38] sm:$0xff]
        %v369 = vld [vmem:[%s262 + $0x40] sm:$0xff]
        %v370 = vld [vmem:[%s262 + $0x48] sm:$0xff]
        %v371 = vld [vmem:[%s262 + $0x50] sm:$0xff]
        %v372 = vld [vmem:[%s262 + $0x58] sm:$0xff]
        %v373 = vld [vmem:[%s262 + $0x60] sm:$0xff]
        %v374 = vld [vmem:[%s262 + $0x68] sm:$0xff]
        %v375 = vld [vmem:[%s262 + $0x70] sm:$0xff]
        %v376 = vld [vmem:[%s262 + $0x78] sm:$0xff]
        %v377 = vld [vmem:[%s271] sm:$0xff]
        %v378 = vld [vmem:[%s271 + $0x8] sm:$0xff]
        %v379 = vld [vmem:[%s271 + $0x10] sm:$0xff]
        %v380 = vld [vmem:[%s271 + $0x18] sm:$0xff]
        %v381 = vld [vmem:[%s271 + $0x20] sm:$0xff]
        %v382 = vld [vmem:[%s271 + $0x28] sm:$0xff]
        %v383 = vld [vmem:[%s271 + $0x30] sm:$0xff]
        %v384 = vld [vmem:[%s271 + $0x38] sm:$0xff]
        %v385 = vld [vmem:[%s271 + $0x40] sm:$0xff]
        %v386 = vld [vmem:[%s271 + $0x48] sm:$0xff]
        %v387 = vld [vmem:[%s271 + $0x50] sm:$0xff]
        %v388 = vld [vmem:[%s271 + $0x58] sm:$0xff]
        %v389 = vld [vmem:[%s271 + $0x60] sm:$0xff]
        %v390 = vld [vmem:[%s271 + $0x68] sm:$0xff]
        %v391 = vld [vmem:[%s271 + $0x70] sm:$0xff]
        %v392 = vld [vmem:[%s271 + $0x78] sm:$0xff]
        %393 = vmatprep.subr.mxu0 0.0
        %394 = vmatpush1.msra.mxu0 %v392
        %395 = vmatprep.subr.mxu0 0.0
        %396 = vmatpush1.msra.mxu0 %v391
        %397 = vmatprep.subr.mxu0 0.0
        %398 = vmatpush1.msra.mxu0 %v390
        %399 = vmatprep.subr.mxu0 0.0
        %400 = vmatpush1.msra.mxu0 %v389
        %401 = vmatprep.subr.mxu0 0.0
        %402 = vmatpush1.msra.mxu0 %v388
        %403 = vmatprep.subr.mxu0 0.0
        %404 = vmatpush1.msra.mxu0 %v387
        %405 = vmatprep.subr.mxu0 0.0
        %406 = vmatpush1.msra.mxu0 %v386
        %407 = vmatprep.subr.mxu0 0.0
        %408 = vmatpush1.msra.mxu0 %v385
        %409 = vmatprep.subr.mxu0 0.0
        %410 = vmatpush1.msra.mxu0 %v384
        %411 = vmatprep.subr.mxu0 0.0
        %412 = vmatpush1.msra.mxu0 %v383
        %413 = vmatprep.subr.mxu0 0.0
        %414 = vmatpush1.msra.mxu0 %v382
        %415 = vmatprep.subr.mxu0 0.0
        %416 = vmatpush1.msra.mxu0 %v381
        %417 = vmatprep.subr.mxu0 0.0
        %418 = vmatpush1.msra.mxu0 %v380
        %419 = vmatprep.subr.mxu0 0.0
        %420 = vmatpush1.msra.mxu0 %v379
        %421 = vmatprep.subr.mxu0 0.0
        %422 = vmatpush1.msra.mxu0 %v378
        %423 = vmatprep.subr.mxu0 0.0
        %424 = vmatpush1.msra.mxu0 %v377
        %425 = vmatprep.subr.mxu0 0.0
        %426 = vmatpush2.msra.mxu0 0.0
        %427 = vmatprep.subr.mxu0 0.0
        %428 = vmatpush2.msra.mxu0 0.0
        %429 = vmatprep.subr.mxu0 0.0
        %430 = vmatpush2.msra.mxu0 0.0
        %431 = vmatprep.subr.mxu0 0.0
        %432 = vmatpush2.msra.mxu0 0.0
        %433 = vmatprep.subr.mxu0 0.0
        %434 = vmatpush2.msra.mxu0 0.0
        %435 = vmatprep.subr.mxu0 0.0
        %436 = vmatpush2.msra.mxu0 0.0
        %437 = vmatprep.subr.mxu0 0.0
        %438 = vmatpush2.msra.mxu0 0.0
        %439 = vmatprep.subr.mxu0 0.0
        %440 = vmatpush2.msra.mxu0 0.0
        %441 = vmatprep.subr.mxu0 0.0
        %442 = vmatpush2.msra.mxu0 0.0
        %443 = vmatprep.subr.mxu0 0.0
        %444 = vmatpush2.msra.mxu0 0.0
        %445 = vmatprep.subr.mxu0 0.0
        %446 = vmatpush2.msra.mxu0 0.0
        %447 = vmatprep.subr.mxu0 0.0
        %448 = vmatpush2.msra.mxu0 0.0
        %449 = vmatprep.subr.mxu0 0.0
        %450 = vmatpush2.msra.mxu0 0.0
        %451 = vmatprep.subr.mxu0 0.0
        %452 = vmatpush2.msra.mxu0 0.0
        %453 = vmatprep.subr.mxu0 0.0
        %454 = vmatpush2.msra.mxu0 0.0
        %455 = vmatprep.subr.mxu0 0.0
        %456 = vmatpush2.msra.mxu0 0.0
        %457 = vmatprep.mubr.f32.mxu0 0.0
        %458 = vmatmul.mubr.f32.gmra.mxu0 %v361
        %v459 = vpop.f32.mrf.mxu0
        %v460 = vadd.f32 0.0, %v459
        %v461 = vpop.f32.mrf.mxu0
        %462 = vmatprep.mubr.f32.mxu0 0.0
        %463 = vmatmul.mubr.f32.gmra.mxu0 %v362
        %v464 = vpop.f32.mrf.mxu0
        %v465 = vadd.f32 0.0, %v464
        %v466 = vpop.f32.mrf.mxu0
        %467 = vmatprep.mubr.f32.mxu0 0.0
        %468 = vmatmul.mubr.f32.gmra.mxu0 %v363
        %v469 = vpop.f32.mrf.mxu0
        %v470 = vadd.f32 0.0, %v469
        %v471 = vpop.f32.mrf.mxu0
        %472 = vmatprep.mubr.f32.mxu0 0.0
        %473 = vmatmul.mubr.f32.gmra.mxu0 %v364
        %v474 = vpop.f32.mrf.mxu0
        %v475 = vadd.f32 0.0, %v474
        %v476 = vpop.f32.mrf.mxu0
        %477 = vmatprep.mubr.f32.mxu0 0.0
        %478 = vmatmul.mubr.f32.gmra.mxu0 %v365
        %v479 = vpop.f32.mrf.mxu0
        %v480 = vadd.f32 0.0, %v479
        %v481 = vpop.f32.mrf.mxu0
        %482 = vmatprep.mubr.f32.mxu0 0.0
        %483 = vmatmul.mubr.f32.gmra.mxu0 %v366
        %v484 = vpop.f32.mrf.mxu0
        %v485 = vadd.f32 0.0, %v484
        %v486 = vpop.f32.mrf.mxu0
        %487 = vmatprep.mubr.f32.mxu0 0.0
        %488 = vmatmul.mubr.f32.gmra.mxu0 %v367
        %v489 = vpop.f32.mrf.mxu0
        %v490 = vadd.f32 0.0, %v489
        %v491 = vpop.f32.mrf.mxu0
        %492 = vmatprep.mubr.f32.mxu0 0.0
        %493 = vmatmul.mubr.f32.gmra.mxu0 %v368
        %v494 = vpop.f32.mrf.mxu0
        %v495 = vadd.f32 0.0, %v494
        %v496 = vpop.f32.mrf.mxu0
        %497 = vmatprep.mubr.f32.mxu0 0.0
        %498 = vmatmul.mubr.f32.gmra.mxu0 %v369
        %v499 = vpop.f32.mrf.mxu0
        %v500 = vadd.f32 0.0, %v499
        %v501 = vpop.f32.mrf.mxu0
        %502 = vmatprep.mubr.f32.mxu0 0.0
        %503 = vmatmul.mubr.f32.gmra.mxu0 %v370
        %v504 = vpop.f32.mrf.mxu0
        %v505 = vadd.f32 0.0, %v504
        %v506 = vpop.f32.mrf.mxu0
        %507 = vmatprep.mubr.f32.mxu0 0.0
        %508 = vmatmul.mubr.f32.gmra.mxu0 %v371
        %v509 = vpop.f32.mrf.mxu0
        %v510 = vadd.f32 0.0, %v509
        %v511 = vpop.f32.mrf.mxu0
        %512 = vmatprep.mubr.f32.mxu0 0.0
        %513 = vmatmul.mubr.f32.gmra.mxu0 %v372
        %v514 = vpop.f32.mrf.mxu0
        %v515 = vadd.f32 0.0, %v514
        %v516 = vpop.f32.mrf.mxu0
        %517 = vmatprep.mubr.f32.mxu0 0.0
        %518 = vmatmul.mubr.f32.gmra.mxu0 %v373
        %v519 = vpop.f32.mrf.mxu0
        %v520 = vadd.f32 0.0, %v519
        %v521 = vpop.f32.mrf.mxu0
        %522 = vmatprep.mubr.f32.mxu0 0.0
        %523 = vmatmul.mubr.f32.gmra.mxu0 %v374
        %v524 = vpop.f32.mrf.mxu0
        %v525 = vadd.f32 0.0, %v524
        %v526 = vpop.f32.mrf.mxu0
        %527 = vmatprep.mubr.f32.mxu0 0.0
        %528 = vmatmul.mubr.f32.gmra.mxu0 %v375
        %v529 = vpop.f32.mrf.mxu0
        %v530 = vadd.f32 0.0, %v529
        %v531 = vpop.f32.mrf.mxu0
        %532 = vmatprep.mubr.f32.mxu0 0.0
        %533 = vmatmul.mubr.f32.gmra.mxu0 %v376
        %v534 = vpop.f32.mrf.mxu0
        %v535 = vadd.f32 0.0, %v534
        %v536 = vpop.f32.mrf.mxu0
        %537 = vdwg.mxu0
        %v538 = vadd.f32 %v345, %v460
        %v539 = vadd.f32 %v346, %v465
        %v540 = vadd.f32 %v347, %v470
        %v541 = vadd.f32 %v348, %v475
        %v542 = vadd.f32 %v349, %v480
        %v543 = vadd.f32 %v350, %v485
        %v544 = vadd.f32 %v351, %v490
        %v545 = vadd.f32 %v352, %v495
        %v546 = vadd.f32 %v353, %v500
        %v547 = vadd.f32 %v354, %v505
        %v548 = vadd.f32 %v355, %v510
        %v549 = vadd.f32 %v356, %v515
        %v550 = vadd.f32 %v357, %v520
        %v551 = vadd.f32 %v358, %v525
        %v552 = vadd.f32 %v359, %v530
        %v553 = vadd.f32 %v360, %v535
        %554 = vst [vmem:[#allocation2] sm:$0xff] %v538
        %555 = vst [vmem:[#allocation2 + $0x8] sm:$0xff] %v539
        %556 = vst [vmem:[#allocation2 + $0x10] sm:$0xff] %v540
        %557 = vst [vmem:[#allocation2 + $0x18] sm:$0xff] %v541
        %558 = vst [vmem:[#allocation2 + $0x20] sm:$0xff] %v542
        %559 = vst [vmem:[#allocation2 + $0x28] sm:$0xff] %v543
        %560 = vst [vmem:[#allocation2 + $0x30] sm:$0xff] %v544
        %561 = vst [vmem:[#allocation2 + $0x38] sm:$0xff] %v545
        %562 = vst [vmem:[#allocation2 + $0x40] sm:$0xff] %v546
        %563 = vst [vmem:[#allocation2 + $0x48] sm:$0xff] %v547
        %564 = vst [vmem:[#allocation2 + $0x50] sm:$0xff] %v548
        %565 = vst [vmem:[#allocation2 + $0x58] sm:$0xff] %v549
        %566 = vst [vmem:[#allocation2 + $0x60] sm:$0xff] %v550
        %567 = vst [vmem:[#allocation2 + $0x68] sm:$0xff] %v551
        %568 = vst [vmem:[#allocation2 + $0x70] sm:$0xff] %v552
        %569 = vst [vmem:[#allocation2 + $0x78] sm:$0xff] %v553
        %p570 = scmp.eq.s32.totalorder %s33, 1
        // Predicated region
        $region49: #{tpu_custom_call.1} parent=31 // pred_check
          %p571 = pneg %p570
        $region50: #{tpu_custom_call.1} parent=31 // pred_check_branch
          %573 = sbr.rel (%p571) target = $region52
        $region51: #{tpu_custom_call.1} parent=31 // pred_region
          %v574 = vld [vmem:[#allocation2] sm:$0xff]
          %v575 = vld [vmem:[#allocation2 + $0x8] sm:$0xff]
          %v576 = vld [vmem:[#allocation2 + $0x10] sm:$0xff]
          %v577 = vld [vmem:[#allocation2 + $0x18] sm:$0xff]
          %v578 = vld [vmem:[#allocation2 + $0x20] sm:$0xff]
          %v579 = vld [vmem:[#allocation2 + $0x28] sm:$0xff]
          %v580 = vld [vmem:[#allocation2 + $0x30] sm:$0xff]
          %v581 = vld [vmem:[#allocation2 + $0x38] sm:$0xff]
          %v582 = vld [vmem:[#allocation2 + $0x40] sm:$0xff]
          %v583 = vld [vmem:[#allocation2 + $0x48] sm:$0xff]
          %v584 = vld [vmem:[#allocation2 + $0x50] sm:$0xff]
          %v585 = vld [vmem:[#allocation2 + $0x58] sm:$0xff]
          %v586 = vld [vmem:[#allocation2 + $0x60] sm:$0xff]
          %v587 = vld [vmem:[#allocation2 + $0x68] sm:$0xff]
          %v588 = vld [vmem:[#allocation2 + $0x70] sm:$0xff]
          %v589 = vld [vmem:[#allocation2 + $0x78] sm:$0xff]
          %590 = vst [vmem:[%s312] sm:$0xff] %v574
          %591 = vst [vmem:[%s312 + $0x8] sm:$0xff] %v575
          %592 = vst [vmem:[%s312 + $0x10] sm:$0xff] %v576
          %593 = vst [vmem:[%s312 + $0x18] sm:$0xff] %v577
          %594 = vst [vmem:[%s312 + $0x20] sm:$0xff] %v578
          %595 = vst [vmem:[%s312 + $0x28] sm:$0xff] %v579
          %596 = vst [vmem:[%s312 + $0x30] sm:$0xff] %v580
          %597 = vst [vmem:[%s312 + $0x38] sm:$0xff] %v581
          %598 = vst [vmem:[%s312 + $0x40] sm:$0xff] %v582
          %599 = vst [vmem:[%s312 + $0x48] sm:$0xff] %v583
          %600 = vst [vmem:[%s312 + $0x50] sm:$0xff] %v584
          %601 = vst [vmem:[%s312 + $0x58] sm:$0xff] %v585
          %602 = vst [vmem:[%s312 + $0x60] sm:$0xff] %v586
          %603 = vst [vmem:[%s312 + $0x68] sm:$0xff] %v587
          %604 = vst [vmem:[%s312 + $0x70] sm:$0xff] %v588
          %605 = vst [vmem:[%s312 + $0x78] sm:$0xff] %v589
          %v606 = vld [vmem:[%s280] sm:$0xff]
          %v607 = vld [vmem:[%s280 + $0x8] sm:$0xff]
          %v608 = vld [vmem:[%s280 + $0x10] sm:$0xff]
          %v609 = vld [vmem:[%s280 + $0x18] sm:$0xff]
          %v610 = vld [vmem:[%s280 + $0x20] sm:$0xff]
          %v611 = vld [vmem:[%s280 + $0x28] sm:$0xff]
          %v612 = vld [vmem:[%s280 + $0x30] sm:$0xff]
          %v613 = vld [vmem:[%s280 + $0x38] sm:$0xff]
          %v614 = vld [vmem:[%s280 + $0x40] sm:$0xff]
          %v615 = vld [vmem:[%s280 + $0x48] sm:$0xff]
          %v616 = vld [vmem:[%s280 + $0x50] sm:$0xff]
          %v617 = vld [vmem:[%s280 + $0x58] sm:$0xff]
          %v618 = vld [vmem:[%s280 + $0x60] sm:$0xff]
          %v619 = vld [vmem:[%s280 + $0x68] sm:$0xff]
          %v620 = vld [vmem:[%s280 + $0x70] sm:$0xff]
          %v621 = vld [vmem:[%s280 + $0x78] sm:$0xff]
          %v622 = vadd.f32 %v606, %v574
          %v623 = vadd.f32 %v607, %v575
          %v624 = vadd.f32 %v608, %v576
          %v625 = vadd.f32 %v609, %v577
          %v626 = vadd.f32 %v610, %v578
          %v627 = vadd.f32 %v611, %v579
          %v628 = vadd.f32 %v612, %v580
          %v629 = vadd.f32 %v613, %v581
          %v630 = vadd.f32 %v614, %v582
          %v631 = vadd.f32 %v615, %v583
          %v632 = vadd.f32 %v616, %v584
          %v633 = vadd.f32 %v617, %v585
          %v634 = vadd.f32 %v618, %v586
          %v635 = vadd.f32 %v619, %v587
          %v636 = vadd.f32 %v620, %v588
          %v637 = vadd.f32 %v621, %v589
          %638 = vst [vmem:[%s319] sm:$0xff] %v622
          %639 = vst [vmem:[%s319 + $0x8] sm:$0xff] %v623
          %640 = vst [vmem:[%s319 + $0x10] sm:$0xff] %v624
          %641 = vst [vmem:[%s319 + $0x18] sm:$0xff] %v625
          %642 = vst [vmem:[%s319 + $0x20] sm:$0xff] %v626
          %643 = vst [vmem:[%s319 + $0x28] sm:$0xff] %v627
          %644 = vst [vmem:[%s319 + $0x30] sm:$0xff] %v628
          %645 = vst [vmem:[%s319 + $0x38] sm:$0xff] %v629
          %646 = vst [vmem:[%s319 + $0x40] sm:$0xff] %v630
          %647 = vst [vmem:[%s319 + $0x48] sm:$0xff] %v631
          %648 = vst [vmem:[%s319 + $0x50] sm:$0xff] %v632
          %649 = vst [vmem:[%s319 + $0x58] sm:$0xff] %v633
          %650 = vst [vmem:[%s319 + $0x60] sm:$0xff] %v634
          %651 = vst [vmem:[%s319 + $0x68] sm:$0xff] %v635
          %652 = vst [vmem:[%s319 + $0x70] sm:$0xff] %v636
          %653 = vst [vmem:[%s319 + $0x78] sm:$0xff] %v637
        $region52: #{tpu_custom_call.1} parent=31 // pred_fallthru
          _
        %s654 = sand.u32 %s128, 1
        %s655 = scalar_lea.sflag [#allocation5], %s654
        %s656 = sand.u32 %s128, 1
        %s657 = smul.addr %s656, 128
        %s658 = scalar_lea.vmem [#allocation9], %s657
        %s659 = sand.u32 %s154, 1
        %s660 = scalar_lea.sflag [#allocation11], %s659
        %s661 = sand.u32 %s154, 1
        %s662 = smul.addr %s661, 128
        %s663 = scalar_lea.vmem [#allocation10], %s662
        // Predicated region
        $region53: #{tpu_custom_call.1} parent=31 // pred_check
          %p664 = pneg %p138
        $region54: #{tpu_custom_call.1} parent=31 // pred_check_branch
          %666 = sbr.rel (%p664) target = $region56
        $region55: #{tpu_custom_call.1} parent=31 // pred_region
          %s667 = smul.u32 16, %s32
          %s669 = ssub.s32 2048, 2048
          %670 = vsyncadd %s655, %s669
          %s671 = smul.addr %s667, 128
          %s672 = scalar_lea.hbm %s3, %s671
          %s673 = sshll.u32 %s658, 4
          %s674 = int_to_ptr.vmem [resolvable:$true] %s673
          %679 = dma.vmem_to_hbm [thread:$0]  %s674, 2048, %s672, %s655, 128, 128, 8
        $region56: #{tpu_custom_call.1} parent=31 // pred_fallthru
          _
        // Predicated region
        $region57: #{tpu_custom_call.1} parent=31 // pred_check
          %p680 = pneg %p164
        $region58: #{tpu_custom_call.1} parent=31 // pred_check_branch
          %682 = sbr.rel (%p680) target = $region60
        $region59: #{tpu_custom_call.1} parent=31 // pred_region
          %s683 = smul.u32 16, %s32
          %s685 = ssub.s32 2048, 2048
          %686 = vsyncadd %s660, %s685
          %s687 = smul.addr %s683, 128
          %s688 = scalar_lea.hbm %s4, %s687
          %s689 = sshll.u32 %s663, 4
          %s690 = int_to_ptr.vmem [resolvable:$true] %s689
          %695 = dma.vmem_to_hbm [thread:$0]  %s690, 2048, %s688, %s660, 128, 128, 8
        $region60: #{tpu_custom_call.1} parent=31 // pred_fallthru
          _
      $region32: #{tpu_custom_call.1} parent=5 // pred_fallthru
        _
      %p696 = scmp.le.s32.totalorder 2, %s23
      // Predicated region
      $region61: #{tpu_custom_call.1} parent=5 // pred_check
        %p697 = pneg %p696
      $region62: #{tpu_custom_call.1} parent=5 // pred_check_branch
        %699 = sbr.rel (%p697) target = $region64
      $region63: #{tpu_custom_call.1} parent=5 // pred_region
        %s700 = ssub.s32 %s23, 2
        // Predicated region
        $region65: #{tpu_custom_call.1} parent=63 // pred_check
          %p701 = pneg %p144
        $region66: #{tpu_custom_call.1} parent=63 // pred_check_branch
          %703 = sbr.rel (%p701) target = $region68
        $region67: #{tpu_custom_call.1} parent=63 // pred_region
          %s704 = sand.u32 %s129, 1
          %s705 = scalar_lea.sflag [#allocation5], %s704
          %s706 = sand.u32 %s129, 1
          %s707 = smul.addr %s706, 128
          %s708 = scalar_lea.vmem [#allocation9], %s707
          %709 = dma.done %s705, 2048
        $region68: #{tpu_custom_call.1} parent=63 // pred_fallthru
          _
        // Predicated region
        $region69: #{tpu_custom_call.1} parent=63 // pred_check
          %p710 = pneg %p170
        $region70: #{tpu_custom_call.1} parent=63 // pred_check_branch
          %712 = sbr.rel (%p710) target = $region72
        $region71: #{tpu_custom_call.1} parent=63 // pred_region
          %s713 = sand.u32 %s155, 1
          %s714 = scalar_lea.sflag [#allocation11], %s713
          %s715 = sand.u32 %s155, 1
          %s716 = smul.addr %s715, 128
          %s717 = scalar_lea.vmem [#allocation10], %s716
          %718 = dma.done %s714, 2048
        $region72: #{tpu_custom_call.1} parent=63 // pred_fallthru
          _
      $region64: #{tpu_custom_call.1} parent=5 // pred_fallthru
        _
    $region6: #{tpu_custom_call.1} parent=1 // loop_footer
      %s27 = sadd.s32 1, %s23
    $region7: #{tpu_custom_call.1} parent=1 // loop_footer_branch
      %22 = sbr.rel target = $region3
    $region8: #{tpu_custom_call.1} parent=1 // loop_exit
      _
    %719 = vsyncpa [#allocation4], 1
    %s720 = scalar_lea.sflag [#allocation4], 1
    %721 = vsyncpa %s720, 1
    %722 = vsyncpa [#allocation7], 1
    %s723 = scalar_lea.sflag [#allocation7], 1
    %724 = vsyncpa %s723, 1
    %725 = vsyncpa [#allocation5], 1
    %s726 = scalar_lea.sflag [#allocation5], 1
    %727 = vsyncpa %s726, 1
    %728 = vsyncpa [#allocation11], 1
    %s729 = scalar_lea.sflag [#allocation11], 1
    %730 = vsyncpa %s729, 1

</llo_original>
